<compile_context>
chip_gen: v5e
topology: v5e:2x2
jax: 0.10.0
libtpu: 0.0.40
codegen_flags: <defaults>
</compile_context>

<pallas_src>
import jax
import jax.numpy as jnp
from jax.experimental import pallas as pl
from jax.experimental.pallas import tpu as pltpu


BB_INPUT_DIM = 12
MLP_HIDDEN_DIM = 64
MLP_OUTPUT_DIM = 32
MLP_DEPTH = 3  # Linear+ReLU, (depth-2) x [Linear+ReLU], Linear

ROW_CHUNK = 256      # rows processed per inner (unrolled) iteration
MAX_ROW_TILE = 4096  # rows per grid step (multiple of ROW_CHUNK)


def _round_up(x, m):
    return ((x + m - 1) // m) * m


def _choose_row_tile(n):
    """Row tile: multiple of 8 sublanes, >=2 grid steps when possible (v7x megacore),
    capped + aligned to ROW_CHUNK so the in-kernel chunk loop divides evenly."""
    tm = _round_up(max(pl.cdiv(n, 2), 1), 8)
    tm = min(tm, MAX_ROW_TILE)
    if tm > ROW_CHUNK:
        tm = _round_up(tm, ROW_CHUNK)  # MAX_ROW_TILE is a multiple of ROW_CHUNK
    return tm


def _mlp_kernel(x_ref, w1_ref, b1_ref, w2_ref, b2_ref, w3_ref, b3_ref, o_ref):
    tm = x_ref.shape[0]
    chunk = min(ROW_CHUNK, tm)
    n_chunks = tm // chunk  # exact by construction of the row tile

    # Hoist the VMEM-resident weights/biases once per grid step.
    w1 = w1_ref[...]  # (12, 64) bf16
    w2 = w2_ref[...]  # (64, 64) bf16
    w3 = w3_ref[...]  # (64, 32) bf16
    b1 = b1_ref[...]  # (1, 64)  f32
    b2 = b2_ref[...]  # (1, 64)  f32
    b3 = b3_ref[...]  # (1, 32)  f32

    def body(c, carry):
        r0 = pl.multiple_of(c * chunk, chunk)
        x = x_ref[pl.ds(r0, chunk), :].astype(jnp.bfloat16)              # (chunk, 12)
        h = jnp.dot(x, w1, preferred_element_type=jnp.float32) + b1      # (chunk, 64) f32
        h = jnp.maximum(h, 0.0)
        h = jnp.dot(h.astype(jnp.bfloat16), w2,
                    preferred_element_type=jnp.float32) + b2             # (chunk, 64) f32
        h = jnp.maximum(h, 0.0)
        y = jnp.dot(h.astype(jnp.bfloat16), w3,
                    preferred_element_type=jnp.float32) + b3             # (chunk, 32) f32
        o_ref[pl.ds(r0, chunk), :] = y.astype(o_ref.dtype)
        return carry

    # Unrolled chunk loop: bounds f32 intermediates to ~32 vregs per array
    # (no spill traffic onto the vst slot) while keeping the DMA tile large.
    jax.lax.fori_loop(0, n_chunks, body, 0, unroll=True)


def init_params(key, input_dim=BB_INPUT_DIM, hidden_dim=MLP_HIDDEN_DIM,
                output_dim=MLP_OUTPUT_DIM):
    """Deterministic init mimicking nn.Linear default (U[-1/sqrt(fan_in), +])."""
    ks = jax.random.split(key, 6)

    def lin(kw, kb, fan_in, fan_out):
        bound = 1.0 / jnp.sqrt(jnp.float32(fan_in))
        w = jax.random.uniform(kw, (fan_in, fan_out), jnp.float32, -bound, bound)
        b = jax.random.uniform(kb, (1, fan_out), jnp.float32, -bound, bound)
        return w, b

    w1, b1 = lin(ks[0], ks[1], input_dim, hidden_dim)
    w2, b2 = lin(ks[2], ks[3], hidden_dim, hidden_dim)
    w3, b3 = lin(ks[4], ks[5], hidden_dim, output_dim)
    return dict(w1=w1, b1=b1, w2=w2, b2=b2, w3=w3, b3=b3)


def bounding_box_tokenizer(part_bbs, params, out_dtype=jnp.bfloat16):
    """part_bbs: (B, P, a, b) with a*b == 12 -> pose_tokens: (B, P, 32).

    out_dtype=jnp.bfloat16 (default) halves output HBM writeback; pass
    jnp.float32 for strict dtype parity with the PyTorch module.
    """
    B, P = part_bbs.shape[0], part_bbs.shape[1]
    x = part_bbs.reshape(B * P, -1)          # free reshape (no data movement)
    if x.dtype != jnp.float32:
        x = x.astype(jnp.float32)
    N, F = x.shape
    assert F == BB_INPUT_DIM

    tm = _choose_row_tile(N)
    grid = (pl.cdiv(N, tm),)                 # ragged trailing block handled by Pallas

    w1 = params["w1"].astype(jnp.bfloat16)                       # (12, 64)
    w2 = params["w2"].astype(jnp.bfloat16)                       # (64, 64)
    w3 = params["w3"].astype(jnp.bfloat16)                       # (64, 32)
    b1 = params["b1"].reshape(1, MLP_HIDDEN_DIM).astype(jnp.float32)
    b2 = params["b2"].reshape(1, MLP_HIDDEN_DIM).astype(jnp.float32)
    b3 = params["b3"].reshape(1, MLP_OUTPUT_DIM).astype(jnp.float32)

    resident = lambda shape: pl.BlockSpec(shape, lambda i: (0, 0))

    out_bytes = jnp.dtype(out_dtype).itemsize
    cost = pl.CostEstimate(
        flops=2 * N * (F * MLP_HIDDEN_DIM
                       + MLP_HIDDEN_DIM * MLP_HIDDEN_DIM
                       + MLP_HIDDEN_DIM * MLP_OUTPUT_DIM),
        transcendentals=0,
        bytes_accessed=(N * (F * 4 + MLP_OUTPUT_DIM * out_bytes)
                        + 2 * (F * MLP_HIDDEN_DIM + MLP_HIDDEN_DIM ** 2
                               + MLP_HIDDEN_DIM * MLP_OUTPUT_DIM)
                        + 4 * (2 * MLP_HIDDEN_DIM + MLP_OUTPUT_DIM)),
    )

    out = pl.pallas_call(
        _mlp_kernel,
        out_shape=jax.ShapeDtypeStruct((N, MLP_OUTPUT_DIM), out_dtype),
        grid=grid,
        in_specs=[
            pl.BlockSpec((tm, F), lambda i: (i, 0)),              # x rows (streamed)
            resident((F, MLP_HIDDEN_DIM)),                        # w1 (VMEM-resident)
            resident((1, MLP_HIDDEN_DIM)),                        # b1
            resident((MLP_HIDDEN_DIM, MLP_HIDDEN_DIM)),           # w2
            resident((1, MLP_HIDDEN_DIM)),                        # b2
            resident((MLP_HIDDEN_DIM, MLP_OUTPUT_DIM)),           # w3
            resident((1, MLP_OUTPUT_DIM)),                        # b3
        ],
        out_specs=pl.BlockSpec((tm, MLP_OUTPUT_DIM), lambda i: (i, 0)),
        compiler_params=pltpu.CompilerParams(
            dimension_semantics=("parallel",)),                   # v7x megacore sharding
        cost_estimate=cost,
    )(x, w1, b1, w2, b2, w3, b3)

    return out.reshape(B, P, MLP_OUTPUT_DIM)  # free reshape


def _reference(part_bbs, params, mirror_kernel=True):
    """Pure-JAX reference. mirror_kernel=True casts matmul operands to bf16
    (f32 accumulation / activations), matching the kernel's numerics."""
    B, P = part_bbs.shape[0], part_bbs.shape[1]
    x = part_bbs.reshape(B * P, -1).astype(jnp.float32)
    cast = (lambda a: a.astype(jnp.bfloat16)) if mirror_kernel else (lambda a: a)
    h = jnp.dot(cast(x), cast(params["w1"]),
                preferred_element_type=jnp.float32) + params["b1"].reshape(1, -1)
    h = jnp.maximum(h, 0.0)
    h = jnp.dot(cast(h), cast(params["w2"]),
                preferred_element_type=jnp.float32) + params["b2"].reshape(1, -1)
    h = jnp.maximum(h, 0.0)
    y = jnp.dot(cast(h), cast(params["w3"]),
                preferred_element_type=jnp.float32) + params["b3"].reshape(1, -1)
    return y.reshape(B, P, MLP_OUTPUT_DIM)


if __name__ == "__main__":
    key = jax.random.PRNGKey(0)
    k_in, k_in2, k_par = jax.random.split(key, 3)

    params = init_params(k_par)

    # Case 1: small shape from the module spec (B=2, P=8 parts, 4x3 = 12 bbox dims),
    # default bf16 output. grid has 2 steps (tile=8 rows).
    B, P = 2, 8
    part_bbs = jax.random.normal(k_in, (B, P, 4, 3), jnp.float32)
    pose_tokens = jax.block_until_ready(bounding_box_tokenizer(part_bbs, params))
    assert pose_tokens.shape == (B, P, MLP_OUTPUT_DIM)
    assert pose_tokens.dtype == jnp.bfloat16

    ref_mirror = _reference(part_bbs, params, mirror_kernel=True)
    ref_f32 = _reference(part_bbs, params, mirror_kernel=False)
    pose_f32 = pose_tokens.astype(jnp.float32)
    assert jnp.allclose(pose_f32, ref_mirror, atol=2e-2, rtol=2e-2)
    assert jnp.allclose(pose_f32, ref_f32, atol=5e-2, rtol=5e-2)

    # Case 2: N not divisible by the row tile (ragged trailing block) with strict
    # f32 output parity path.
    B2, P2 = 3, 37
    part_bbs2 = jax.random.normal(k_in2, (B2, P2, 4, 3), jnp.float32)
    pose2 = jax.block_until_ready(
        bounding_box_tokenizer(part_bbs2, params, out_dtype=jnp.float32))
    assert pose2.shape == (B2, P2, MLP_OUTPUT_DIM)
    assert pose2.dtype == jnp.float32
    ref2 = _reference(part_bbs2, params, mirror_kernel=True)
    assert jnp.allclose(pose2, ref2, atol=2e-3, rtol=2e-3)
    assert jnp.allclose(pose2, _reference(part_bbs2, params, mirror_kernel=False),
                        atol=5e-2, rtol=5e-2)

    print("KERNEL_OK")
</pallas_src>

<mosaic_0001>
module attributes {stable_mosaic.version = 11 : i64} {
  func.func @_mlp_kernel(%arg0: i32, %arg1: memref<8x12xf32, #tpu.memory_space<vmem>>, %arg2: memref<12x64xbf16, #tpu.memory_space<vmem>>, %arg3: memref<1x64xf32, #tpu.memory_space<vmem>>, %arg4: memref<64x64xbf16, #tpu.memory_space<vmem>>, %arg5: memref<1x64xf32, #tpu.memory_space<vmem>>, %arg6: memref<64x32xbf16, #tpu.memory_space<vmem>>, %arg7: memref<1x32xf32, #tpu.memory_space<vmem>>, %arg8: memref<8x32xbf16, #tpu.memory_space<vmem>>) attributes {dimension_semantics = [#tpu.dimension_semantics<parallel>], iteration_bounds = array<i64: 2>, scalar_prefetch = 0 : i64, scratch_operands = 0 : i64, tpu.core_type = #tpu.core_type<tc>, window_params = [{transform_indices = @transform_0, window_bounds = array<i64: 8, 12>}, {pipeline_mode = #tpu.pipeline_mode<synchronous>, transform_indices = @transform_1, window_bounds = array<i64: 12, 64>}, {pipeline_mode = #tpu.pipeline_mode<synchronous>, transform_indices = @transform_2, window_bounds = array<i64: 1, 64>}, {pipeline_mode = #tpu.pipeline_mode<synchronous>, transform_indices = @transform_3, window_bounds = array<i64: 64, 64>}, {pipeline_mode = #tpu.pipeline_mode<synchronous>, transform_indices = @transform_4, window_bounds = array<i64: 1, 64>}, {pipeline_mode = #tpu.pipeline_mode<synchronous>, transform_indices = @transform_5, window_bounds = array<i64: 64, 32>}, {pipeline_mode = #tpu.pipeline_mode<synchronous>, transform_indices = @transform_6, window_bounds = array<i64: 1, 32>}, {transform_indices = @transform_7, window_bounds = array<i64: 8, 32>}]} {
    %c0 = arith.constant 0 : index
    %c0_0 = arith.constant 0 : index
    %0 = vector.load %arg2[%c0, %c0_0] : memref<12x64xbf16, #tpu.memory_space<vmem>>, vector<12x64xbf16>
    %c0_1 = arith.constant 0 : index
    %c0_2 = arith.constant 0 : index
    %1 = vector.load %arg4[%c0_1, %c0_2] : memref<64x64xbf16, #tpu.memory_space<vmem>>, vector<64x64xbf16>
    %c0_3 = arith.constant 0 : index
    %c0_4 = arith.constant 0 : index
    %2 = vector.load %arg6[%c0_3, %c0_4] : memref<64x32xbf16, #tpu.memory_space<vmem>>, vector<64x32xbf16>
    %c0_5 = arith.constant 0 : index
    %c0_6 = arith.constant 0 : index
    %3 = vector.load %arg3[%c0_5, %c0_6] : memref<1x64xf32, #tpu.memory_space<vmem>>, vector<1x64xf32>
    %c0_7 = arith.constant 0 : index
    %c0_8 = arith.constant 0 : index
    %4 = vector.load %arg5[%c0_7, %c0_8] : memref<1x64xf32, #tpu.memory_space<vmem>>, vector<1x64xf32>
    %c0_9 = arith.constant 0 : index
    %c0_10 = arith.constant 0 : index
    %5 = vector.load %arg7[%c0_9, %c0_10] : memref<1x32xf32, #tpu.memory_space<vmem>>, vector<1x32xf32>
    %c0_i32 = arith.constant 0 : i32
    %c8_i32 = arith.constant 8 : i32
    %6 = arith.muli %c0_i32, %c8_i32 : i32
    %7 = tpu.assume_multiple %6, 8 : i32
    %8 = arith.index_cast %7 : i32 to index
    %c0_11 = arith.constant 0 : index
    %9 = vector.load %arg1[%8, %c0_11] : memref<8x12xf32, #tpu.memory_space<vmem>>, vector<8x12xf32>
    %10 = arith.truncf %9 : vector<8x12xf32> to vector<8x12xbf16>
    %cst = arith.constant dense<0.000000e+00> : vector<8x64xf32>
    %11 = tpu.matmul %10, %0, %cst {dimension_numbers = #tpu.dot_dimension_numbers<[1], [0], [0], [1], [0, 0, 1, 1], [], []>} : vector<8x12xbf16>, vector<12x64xbf16>, vector<8x64xf32> -> vector<8x64xf32>
    %12 = vector.broadcast %3 : vector<1x64xf32> to vector<8x64xf32>
    %13 = arith.addf %11, %12 : vector<8x64xf32>
    %cst_12 = arith.constant 0.000000e+00 : f32
    %14 = vector.broadcast %cst_12 : f32 to vector<8x64xf32>
    %15 = arith.maximumf %13, %14 : vector<8x64xf32>
    %16 = arith.truncf %15 : vector<8x64xf32> to vector<8x64xbf16>
    %cst_13 = arith.constant dense<0.000000e+00> : vector<8x64xf32>
    %17 = tpu.matmul %16, %1, %cst_13 {dimension_numbers = #tpu.dot_dimension_numbers<[1], [0], [0], [1], [0, 0, 1, 1], [], []>} : vector<8x64xbf16>, vector<64x64xbf16>, vector<8x64xf32> -> vector<8x64xf32>
    %18 = vector.broadcast %4 : vector<1x64xf32> to vector<8x64xf32>
    %19 = arith.addf %17, %18 : vector<8x64xf32>
    %cst_14 = arith.constant 0.000000e+00 : f32
    %20 = vector.broadcast %cst_14 : f32 to vector<8x64xf32>
    %21 = arith.maximumf %19, %20 : vector<8x64xf32>
    %22 = arith.truncf %21 : vector<8x64xf32> to vector<8x64xbf16>
    %cst_15 = arith.constant dense<0.000000e+00> : vector<8x32xf32>
    %23 = tpu.matmul %22, %2, %cst_15 {dimension_numbers = #tpu.dot_dimension_numbers<[1], [0], [0], [1], [0, 0, 1, 1], [], []>} : vector<8x64xbf16>, vector<64x32xbf16>, vector<8x32xf32> -> vector<8x32xf32>
    %24 = vector.broadcast %5 : vector<1x32xf32> to vector<8x32xf32>
    %25 = arith.addf %23, %24 : vector<8x32xf32>
    %26 = arith.truncf %25 : vector<8x32xf32> to vector<8x32xbf16>
    %27 = arith.index_cast %7 : i32 to index
    %c0_16 = arith.constant 0 : index
    %28 = vector.load %arg8[%27, %c0_16] : memref<8x32xbf16, #tpu.memory_space<vmem>>, vector<8x32xbf16>
    tpu.vector_store %arg8[%27, %c0_16], %26 {strides = array<i32>} : memref<8x32xbf16, #tpu.memory_space<vmem>>, vector<8x32xbf16>,
    %c1_i32 = arith.constant 1 : i32
    return
  }
  func.func @transform_0(%arg0: i32) -> (i32, i32) {
    %c0_i32 = arith.constant 0 : i32
    %c0_i32_0 = arith.constant 0 : i32
    return %arg0, %c0_i32 : i32, i32
  }
  func.func @transform_1(%arg0: i32) -> (i32, i32) {
    %c0_i32 = arith.constant 0 : i32
    %c0_i32_0 = arith.constant 0 : i32
    %c0_i32_1 = arith.constant 0 : i32
    return %c0_i32, %c0_i32_0 : i32, i32
  }
  func.func @transform_2(%arg0: i32) -> (i32, i32) {
    %c0_i32 = arith.constant 0 : i32
    %c0_i32_0 = arith.constant 0 : i32
    %c0_i32_1 = arith.constant 0 : i32
    return %c0_i32, %c0_i32_0 : i32, i32
  }
  func.func @transform_3(%arg0: i32) -> (i32, i32) {
    %c0_i32 = arith.constant 0 : i32
    %c0_i32_0 = arith.constant 0 : i32
    %c0_i32_1 = arith.constant 0 : i32
    return %c0_i32, %c0_i32_0 : i32, i32
  }
  func.func @transform_4(%arg0: i32) -> (i32, i32) {
    %c0_i32 = arith.constant 0 : i32
    %c0_i32_0 = arith.constant 0 : i32
    %c0_i32_1 = arith.constant 0 : i32
    return %c0_i32, %c0_i32_0 : i32, i32
  }
  func.func @transform_5(%arg0: i32) -> (i32, i32) {
    %c0_i32 = arith.constant 0 : i32
    %c0_i32_0 = arith.constant 0 : i32
    %c0_i32_1 = arith.constant 0 : i32
    return %c0_i32, %c0_i32_0 : i32, i32
  }
  func.func @transform_6(%arg0: i32) -> (i32, i32) {
    %c0_i32 = arith.constant 0 : i32
    %c0_i32_0 = arith.constant 0 : i32
    %c0_i32_1 = arith.constant 0 : i32
    return %c0_i32, %c0_i32_0 : i32, i32
  }
  func.func @transform_7(%arg0: i32) -> (i32, i32) {
    %c0_i32 = arith.constant 0 : i32
    %c0_i32_0 = arith.constant 0 : i32
    return %arg0, %c0_i32 : i32, i32
  }
}

</mosaic_0001>

<llo_original>
// kernel: tpu_custom_call.1
$region0: #{tpu_custom_call.1}
  #allocation0 [shape = 'u32[]', space=smem, size = 0x4, offset = 0x4, fixed_abs, tag = 'smem constant byte address 0x4 - core index']
  #allocation1 [shape = 'u32[72,128]{1,0:T(1,128)}', space=vmem, size = 0x9000, scoped, tag = 'internal scratch']
  %s0 = inlined_call_operand.vmem [shape: f32[16,12], index: 0, kind: input, shape index: {}]
  %s1 = inlined_call_operand.hbm [shape: bf16[12,64], index: 1, kind: input, shape index: {}]
  %s2 = inlined_call_operand.vmem [shape: f32[1,64], index: 2, kind: input, shape index: {}]
  %s3 = inlined_call_operand.vmem [shape: bf16[64,64], index: 3, kind: input, shape index: {}]
  %s4 = inlined_call_operand.vmem [shape: f32[1,64], index: 4, kind: input, shape index: {}]
  %s5 = inlined_call_operand.vmem [shape: bf16[64,32], index: 5, kind: input, shape index: {}]
  %s6 = inlined_call_operand.vmem [shape: f32[1,32], index: 6, kind: input, shape index: {}]
  %s7 = inlined_call_operand.hbm [shape: bf16[16,32], index: 7, kind: output, shape index: {}]
  %s8 = sld [smem:[#allocation0]]
  $region65: #{tpu_custom_call.1} parent=0
    _
  %s10 = ssub.s32 1, %s8
  %s11 = scalar_select 0, %s10, %s8
  $region1: #{tpu_custom_call.1} parent=0
    #allocation2 [shape = 'u8[4096]{0}', space=vmem, size = 0x1000, scoped, tag = 'input window, operand 1, single buffered']
    #allocation3 [shape = 's32[2]{0}', space=sflag, size = 0x8, scoped, tag = 'scoped memory for tpu_custom_call.1']
    #allocation4 [shape = 's32[2]{0}', space=sflag, size = 0x8, scoped, tag = 'scoped memory for tpu_custom_call.1']
    #allocation5 [shape = 'u8[4096]{0}', space=vmem, size = 0x1000, scoped, tag = 'output window, operand 0']
    %12 = vsyncpa [#allocation3], 0
    %13 = vsyncpa [#allocation4], 0
    %s14 = scalar_lea.sflag [#allocation4], 1
    %15 = vsyncpa %s14, 0
    loop: start=0, step=1, limit=4
    $region2: #{tpu_custom_call.1} parent=1 // loop_pre_header
      _
    $region3: #{tpu_custom_call.1} parent=1 // loop_header
      %s17 = sphi 0, %s21
      %p18 = scmp.ge.s32.totalorder %s17, 4
      %s27 = sphi 0, %s29
      %s30 = sphi 0, %s27
      %s31 = sphi 0, %s30
      %s47 = sphi 0, %s31
      %s51 = sphi 0, %s51
      %s53 = sphi 0, %s51
      %s54 = sphi 0, %s53
      %s68 = sphi 0, %s54
      %s72 = sphi 0, %s72
      %s74 = sphi 0, %s72
      %s75 = sphi 0, %s74
      %s89 = sphi 0, %s75
      %s93 = sphi 0, %s93
      %s95 = sphi 0, %s93
      %s96 = sphi 0, %s95
      %s110 = sphi 0, %s96
      %s114 = sphi 0, %s114
      %s116 = sphi 0, %s114
      %s117 = sphi 0, %s116
      %s131 = sphi 0, %s117
      %s135 = sphi 0, %s135
      %s137 = sphi 0, %s135
      %s138 = sphi 0, %s137
      %s152 = sphi 0, %s138
      %s156 = sphi 0, %s156
      %s158 = sphi 0, %s156
      %s159 = sphi 0, %s158
      %s173 = sphi 0, %s159
      %s179 = sphi 0, %s181
      %s182 = sphi 0, %s179
      %s183 = sphi 0, %s182
      %s199 = sphi 0, %s183
    $region4: #{tpu_custom_call.1} parent=1 // loop_header_branch
      %20 = sbr.rel (%p18) target = $region8
    $region5: #{tpu_custom_call.1} parent=1 // loop_body
      %s22 = ssub.s32 %s17, 1
      %s23 = ssub.s32 %s17, 2
      %s24 = sadd.s32 %s17, 1
      %s25 = ssub.s32 %s17, %s24
      %p26 = scmp.eq.s32.totalorder %s25, 0
      %s28 = sadd.s32 %s27, 1
      %s29 = scalar_select %p26, %s27, %s28
      %p32 = pneg %p26
      %p33 = scmp.eq.s32.totalorder %s17, 1
      %p34 = por %p32, %p33
      %p35 = scmp.ne.s32.totalorder %s27, %s30
      %p36 = scmp.eq.s32.totalorder %s17, 0
      %p37 = por %p35, %p36
      %p38 = scmp.ne.s32.totalorder %s27, %s30
      %p39 = scmp.eq.s32.totalorder %s22, 1
      %p40 = por %p38, %p39
      %p41 = scmp.ne.s32.totalorder %s30, %s31
      %p42 = scmp.eq.s32.totalorder %s22, 0
      %p43 = por %p41, %p42
      %p44 = scmp.ne.s32.totalorder %s30, %s31
      %p45 = scmp.eq.s32.totalorder %s23, 1
      %p46 = por %p44, %p45
      %p48 = scmp.ne.s32.totalorder %s31, %s47
      %p49 = scmp.eq.s32.totalorder %s23, 0
      %p50 = por %p48, %p49
      %s52 = sadd.s32 %s51, 1
      %p55 = scmp.eq.s32.totalorder %s17, 1
      %p56 = scmp.ne.s32.totalorder %s51, %s53
      %p57 = scmp.eq.s32.totalorder %s17, 0
      %p58 = por %p56, %p57
      %p59 = scmp.ne.s32.totalorder %s51, %s53
      %p60 = scmp.eq.s32.totalorder %s22, 1
      %p61 = por %p59, %p60
      %p62 = scmp.ne.s32.totalorder %s53, %s54
      %p63 = scmp.eq.s32.totalorder %s22, 0
      %p64 = por %p62, %p63
      %p65 = scmp.ne.s32.totalorder %s53, %s54
      %p66 = scmp.eq.s32.totalorder %s23, 1
      %p67 = por %p65, %p66
      %p69 = scmp.ne.s32.totalorder %s54, %s68
      %p70 = scmp.eq.s32.totalorder %s23, 0
      %p71 = por %p69, %p70
      %s73 = sadd.s32 %s72, 1
      %p76 = scmp.eq.s32.totalorder %s17, 1
      %p77 = scmp.ne.s32.totalorder %s72, %s74
      %p78 = scmp.eq.s32.totalorder %s17, 0
      %p79 = por %p77, %p78
      %p80 = scmp.ne.s32.totalorder %s72, %s74
      %p81 = scmp.eq.s32.totalorder %s22, 1
      %p82 = por %p80, %p81
      %p83 = scmp.ne.s32.totalorder %s74, %s75
      %p84 = scmp.eq.s32.totalorder %s22, 0
      %p85 = por %p83, %p84
      %p86 = scmp.ne.s32.totalorder %s74, %s75
      %p87 = scmp.eq.s32.totalorder %s23, 1
      %p88 = por %p86, %p87
      %p90 = scmp.ne.s32.totalorder %s75, %s89
      %p91 = scmp.eq.s32.totalorder %s23, 0
      %p92 = por %p90, %p91
      %s94 = sadd.s32 %s93, 1
      %p97 = scmp.eq.s32.totalorder %s17, 1
      %p98 = scmp.ne.s32.totalorder %s93, %s95
      %p99 = scmp.eq.s32.totalorder %s17, 0
      %p100 = por %p98, %p99
      %p101 = scmp.ne.s32.totalorder %s93, %s95
      %p102 = scmp.eq.s32.totalorder %s22, 1
      %p103 = por %p101, %p102
      %p104 = scmp.ne.s32.totalorder %s95, %s96
      %p105 = scmp.eq.s32.totalorder %s22, 0
      %p106 = por %p104, %p105
      %p107 = scmp.ne.s32.totalorder %s95, %s96
      %p108 = scmp.eq.s32.totalorder %s23, 1
      %p109 = por %p107, %p108
      %p111 = scmp.ne.s32.totalorder %s96, %s110
      %p112 = scmp.eq.s32.totalorder %s23, 0
      %p113 = por %p111, %p112
      %s115 = sadd.s32 %s114, 1
      %p118 = scmp.eq.s32.totalorder %s17, 1
      %p119 = scmp.ne.s32.totalorder %s114, %s116
      %p120 = scmp.eq.s32.totalorder %s17, 0
      %p121 = por %p119, %p120
      %p122 = scmp.ne.s32.totalorder %s114, %s116
      %p123 = scmp.eq.s32.totalorder %s22, 1
      %p124 = por %p122, %p123
      %p125 = scmp.ne.s32.totalorder %s116, %s117
      %p126 = scmp.eq.s32.totalorder %s22, 0
      %p127 = por %p125, %p126
      %p128 = scmp.ne.s32.totalorder %s116, %s117
      %p129 = scmp.eq.s32.totalorder %s23, 1
      %p130 = por %p128, %p129
      %p132 = scmp.ne.s32.totalorder %s117, %s131
      %p133 = scmp.eq.s32.totalorder %s23, 0
      %p134 = por %p132, %p133
      %s136 = sadd.s32 %s135, 1
      %p139 = scmp.eq.s32.totalorder %s17, 1
      %p140 = scmp.ne.s32.totalorder %s135, %s137
      %p141 = scmp.eq.s32.totalorder %s17, 0
      %p142 = por %p140, %p141
      %p143 = scmp.ne.s32.totalorder %s135, %s137
      %p144 = scmp.eq.s32.totalorder %s22, 1
      %p145 = por %p143, %p144
      %p146 = scmp.ne.s32.totalorder %s137, %s138
      %p147 = scmp.eq.s32.totalorder %s22, 0
      %p148 = por %p146, %p147
      %p149 = scmp.ne.s32.totalorder %s137, %s138
      %p150 = scmp.eq.s32.totalorder %s23, 1
      %p151 = por %p149, %p150
      %p153 = scmp.ne.s32.totalorder %s138, %s152
      %p154 = scmp.eq.s32.totalorder %s23, 0
      %p155 = por %p153, %p154
      %s157 = sadd.s32 %s156, 1
      %p160 = scmp.eq.s32.totalorder %s17, 1
      %p161 = scmp.ne.s32.totalorder %s156, %s158
      %p162 = scmp.eq.s32.totalorder %s17, 0
      %p163 = por %p161, %p162
      %p164 = scmp.ne.s32.totalorder %s156, %s158
      %p165 = scmp.eq.s32.totalorder %s22, 1
      %p166 = por %p164, %p165
      %p167 = scmp.ne.s32.totalorder %s158, %s159
      %p168 = scmp.eq.s32.totalorder %s22, 0
      %p169 = por %p167, %p168
      %p170 = scmp.ne.s32.totalorder %s158, %s159
      %p171 = scmp.eq.s32.totalorder %s23, 1
      %p172 = por %p170, %p171
      %p174 = scmp.ne.s32.totalorder %s159, %s173
      %p175 = scmp.eq.s32.totalorder %s23, 0
      %p176 = por %p174, %p175
      %s177 = ssub.s32 %s17, %s24
      %p178 = scmp.eq.s32.totalorder %s177, 0
      %s180 = sadd.s32 %s179, 1
      %s181 = scalar_select %p178, %s179, %s180
      %p184 = pneg %p178
      %p185 = scmp.eq.s32.totalorder %s17, 1
      %p186 = por %p184, %p185
      %p187 = scmp.ne.s32.totalorder %s179, %s182
      %p188 = scmp.eq.s32.totalorder %s17, 0
      %p189 = por %p187, %p188
      %p190 = scmp.ne.s32.totalorder %s179, %s182
      %p191 = scmp.eq.s32.totalorder %s22, 1
      %p192 = por %p190, %p191
      %p193 = scmp.ne.s32.totalorder %s182, %s183
      %p194 = scmp.eq.s32.totalorder %s22, 0
      %p195 = por %p193, %p194
      %p196 = scmp.ne.s32.totalorder %s182, %s183
      %p197 = scmp.eq.s32.totalorder %s23, 1
      %p198 = por %p196, %p197
      %p200 = scmp.ne.s32.totalorder %s183, %s199
      %p201 = scmp.eq.s32.totalorder %s23, 0
      %p202 = por %p200, %p201
      %p203 = scmp.le.s32.totalorder 1, %s17
      %p204 = scmp.lt.s32.totalorder %s17, 3
      %p205 = pnand %p203, %p204
      %p206 = pneg %p205
      // Predicated region
      $region9: #{tpu_custom_call.1} parent=5 // pred_check
        _
      $region10: #{tpu_custom_call.1} parent=5 // pred_check_branch
        %208 = sbr.rel (%p205) target = $region12
      $region11: #{tpu_custom_call.1} parent=5 // pred_region
        %s209 = ssub.s32 %s17, 1
        // Predicated region
        $region13: #{tpu_custom_call.1} parent=11 // pred_check
          %p210 = pneg %p64
        $region14: #{tpu_custom_call.1} parent=11 // pred_check_branch
          %212 = sbr.rel (%p210) target = $region16
        $region15: #{tpu_custom_call.1} parent=11 // pred_region
          %214 = vsyncadd [#allocation3], 0
          %s215 = sshll.u32 %s1, 4
          %s216 = int_to_ptr.hbm [resolvable:$true] %s215
          %s217 = sshll.u32 [#allocation2], 4
          %s218 = int_to_ptr.vmem [resolvable:$true] %s217
          %223 = dma.hbm_to_vmem [thread:$0]  %s216, 128, %s218, [#allocation3], 64, 64, 4
        $region16: #{tpu_custom_call.1} parent=11 // pred_fallthru
          _
        // Predicated region
        $region17: #{tpu_custom_call.1} parent=11 // pred_check
          %p224 = pneg %p85
        $region18: #{tpu_custom_call.1} parent=11 // pred_check_branch
          %226 = sbr.rel (%p224) target = $region20
        $region19: #{tpu_custom_call.1} parent=11 // pred_region
          _
        $region20: #{tpu_custom_call.1} parent=11 // pred_fallthru
          _
        // Predicated region
        $region21: #{tpu_custom_call.1} parent=11 // pred_check
          %p227 = pneg %p106
        $region22: #{tpu_custom_call.1} parent=11 // pred_check_branch
          %229 = sbr.rel (%p227) target = $region24
        $region23: #{tpu_custom_call.1} parent=11 // pred_region
          _
        $region24: #{tpu_custom_call.1} parent=11 // pred_fallthru
          _
        // Predicated region
        $region25: #{tpu_custom_call.1} parent=11 // pred_check
          %p230 = pneg %p127
        $region26: #{tpu_custom_call.1} parent=11 // pred_check_branch
          %232 = sbr.rel (%p230) target = $region28
        $region27: #{tpu_custom_call.1} parent=11 // pred_region
          _
        $region28: #{tpu_custom_call.1} parent=11 // pred_fallthru
          _
        // Predicated region
        $region29: #{tpu_custom_call.1} parent=11 // pred_check
          %p233 = pneg %p148
        $region30: #{tpu_custom_call.1} parent=11 // pred_check_branch
          %235 = sbr.rel (%p233) target = $region32
        $region31: #{tpu_custom_call.1} parent=11 // pred_region
          _
        $region32: #{tpu_custom_call.1} parent=11 // pred_fallthru
          _
        // Predicated region
        $region33: #{tpu_custom_call.1} parent=11 // pred_check
          %p236 = pneg %p169
        $region34: #{tpu_custom_call.1} parent=11 // pred_check_branch
          %238 = sbr.rel (%p236) target = $region36
        $region35: #{tpu_custom_call.1} parent=11 // pred_region
          _
        $region36: #{tpu_custom_call.1} parent=11 // pred_fallthru
          _
      $region12: #{tpu_custom_call.1} parent=5 // pred_fallthru
        _
      %p239 = scmp.lt.s32.totalorder %s17, 2
      // Predicated region
      $region37: #{tpu_custom_call.1} parent=5 // pred_check
        %p240 = pneg %p239
      $region38: #{tpu_custom_call.1} parent=5 // pred_check_branch
        %242 = sbr.rel (%p240) target = $region40
      $region39: #{tpu_custom_call.1} parent=5 // pred_region
        // Predicated region
        $region41: #{tpu_custom_call.1} parent=39 // pred_check
          %p243 = pneg %p37
        $region42: #{tpu_custom_call.1} parent=39 // pred_check_branch
          %245 = sbr.rel (%p243) target = $region44
        $region43: #{tpu_custom_call.1} parent=39 // pred_region
          %p246 = scmp.lt.s32.totalorder %s17, 1
          %s247 = scalar_select %p246, %s17, 1
          %s248 = smul.addr %s247, 8
          %s249 = scalar_lea.vmem %s0, %s248
        $region44: #{tpu_custom_call.1} parent=39 // pred_fallthru
          _
      $region40: #{tpu_custom_call.1} parent=5 // pred_fallthru
        _
      %p250 = scmp.le.s32.totalorder 1, %s17
      %p251 = scmp.lt.s32.totalorder %s17, 3
      %p252 = pnand %p250, %p251
      %p253 = pneg %p252
      // Predicated region
      $region45: #{tpu_custom_call.1} parent=5 // pred_check
        _
      $region46: #{tpu_custom_call.1} parent=5 // pred_check_branch
        %255 = sbr.rel (%p252) target = $region48
      $region47: #{tpu_custom_call.1} parent=5 // pred_region
        %s256 = ssub.s32 %s17, 1
        // Predicated region
        $region49: #{tpu_custom_call.1} parent=47 // pred_check
          %p257 = pneg %p64
        $region50: #{tpu_custom_call.1} parent=47 // pred_check_branch
          %259 = sbr.rel (%p257) target = $region52
        $region51: #{tpu_custom_call.1} parent=47 // pred_region
          %261 = dma.done [#allocation3], 128
        $region52: #{tpu_custom_call.1} parent=47 // pred_fallthru
          _
        %p262 = scmp.lt.s32.totalorder %s22, 1
        %s263 = scalar_select %p262, %s22, 1
        %s264 = smul.addr %s263, 8
        %s265 = scalar_lea.vmem %s0, %s264
        %p266 = pneg %p43
        %p267 = pneg %p40
        %p268 = pneg %p64
        %p269 = pneg %p61
        %p270 = pneg %p85
        %p271 = pneg %p82
        %p272 = pneg %p106
        %p273 = pneg %p103
        %p274 = pneg %p127
        %p275 = pneg %p124
        %p276 = pneg %p148
        %p277 = pneg %p145
        %p278 = pneg %p169
        %p279 = pneg %p166
        %p280 = pneg %p195
        %p281 = pneg %p192
        %s282 = sand.u32 %s182, 1
        %s283 = scalar_lea.sflag [#allocation4], %s282
        %s284 = sand.u32 %s182, 1
        %s285 = smul.addr %s284, 4
        %s286 = scalar_lea.vmem [#allocation5], %s285
        %p287 = scmp.lt.s32.totalorder %s22, 1
        %s288 = scalar_select %p287, %s22, 1
        %s289 = smul.addr %s288, 8
        %s290 = scalar_lea.vmem %s0, %s289
        %v292 = vld [vmem:[#allocation2] sm:$0xf]
        %v293 = vld [vmem:[#allocation2 + $0x4] sm:$0x3]
        %v294 = vld [vmem:[%s3] sm:$0xf]
        %v295 = vld [vmem:[%s3 + $0x4] sm:$0xf]
        %v296 = vld [vmem:[%s3 + $0x8] sm:$0xf]
        %v297 = vld [vmem:[%s3 + $0xc] sm:$0xf]
        %v298 = vld [vmem:[%s3 + $0x10] sm:$0xf]
        %v299 = vld [vmem:[%s3 + $0x14] sm:$0xf]
        %v300 = vld [vmem:[%s3 + $0x18] sm:$0xf]
        %v301 = vld [vmem:[%s3 + $0x1c] sm:$0xf]
        %v302 = vld [vmem:[%s5] sm:$0xf]
        %v303 = vld [vmem:[%s5 + $0x4] sm:$0xf]
        %v304 = vld [vmem:[%s5 + $0x8] sm:$0xf]
        %v305 = vld [vmem:[%s5 + $0xc] sm:$0xf]
        %v306 = vld [vmem:[%s5 + $0x10] sm:$0xf]
        %v307 = vld [vmem:[%s5 + $0x14] sm:$0xf]
        %v308 = vld [vmem:[%s5 + $0x18] sm:$0xf]
        %v309 = vld [vmem:[%s5 + $0x1c] sm:$0xf]
        %v310 = vld [vmem:[%s2] sm:$0x1]
        %v311 = vld [vmem:[%s4] sm:$0x1]
        %v312 = vld [vmem:[%s6] sm:$0x1]
        %v313 = vld [vmem:[%s290] sm:$0xff]
        %v314 = vpack.c.bf16 %v313, %v313
        %v316 = vperm.slane %v310, 0
        %v320 = vunpack.c.l.b16 %v292
        %v321 = vunpack.c.l.b16 %v293
        %v322 = vpack.c.b16 %v321, %v320
        %vm323 = vcmask 97280
        %v325 = vsel %vm323, %v314, 0
        %vm327 = vcmask 1045504
        %v329 = vsel %vm327, %v322, 0
        %331 = vmatpush.bf16.msra.mxu0 0
        %332 = vmatpush.bf16.msra.mxu0 0
        %333 = vmatpush.bf16.msra.mxu0 0
        %334 = vmatpush.bf16.msra.mxu0 0
        %335 = vmatpush.bf16.msra.mxu0 0
        %336 = vmatpush.bf16.msra.mxu0 0
        %337 = vmatpush.bf16.msra.mxu0 0
        %338 = vmatpush.bf16.msra.mxu0 %v329
        %339 = vmatmul.bf16.gmra.mxu0 %v325
        %v340 = vpop.f32.mrf.mxu0
        %v341 = vadd.f32 %v316, %v340
        %v342 = vpop.f32.mrf.mxu0
        %343 = vdwg.mxu0
        %v344 = vmax.f32 %v341, 0.0
        %v345 = vpack.c.bf16 %v344, %v344
        %v347 = vperm.slane %v311, 0
        %v357 = vunpack.c.l.b16 %v294
        %v358 = vunpack.c.l.b16 %v295
        %v359 = vunpack.c.l.b16 %v296
        %v360 = vunpack.c.l.b16 %v297
        %v361 = vunpack.c.l.b16 %v298
        %v362 = vunpack.c.l.b16 %v299
        %v363 = vunpack.c.l.b16 %v300
        %v364 = vunpack.c.l.b16 %v301
        %v365 = vpack.c.b16 %v358, %v357
        %v366 = vpack.c.b16 %v360, %v359
        %v367 = vpack.c.b16 %v362, %v361
        %v368 = vpack.c.b16 %v364, %v363
        %vm373 = vcmask 523264
        %v375 = vsel %vm373, %v345, 0
        %377 = vmatpush.bf16.msra.mxu0 0
        %378 = vmatpush.bf16.msra.mxu0 0
        %379 = vmatpush.bf16.msra.mxu0 0
        %380 = vmatpush.bf16.msra.mxu0 0
        %381 = vmatpush.bf16.msra.mxu0 %v368
        %382 = vmatpush.bf16.msra.mxu0 %v367
        %383 = vmatpush.bf16.msra.mxu0 %v366
        %384 = vmatpush.bf16.msra.mxu0 %v365
        %385 = vmatmul.bf16.gmra.mxu0 %v375
        %v386 = vpop.f32.mrf.mxu0
        %v387 = vadd.f32 %v347, %v386
        %v388 = vpop.f32.mrf.mxu0
        %389 = vdwg.mxu0
        %v390 = vmax.f32 %v387, 0.0
        %v391 = vpack.c.bf16 %v390, %v390
        %v393 = vperm.slane %v312, 0
        %v403 = vunpack.c.l.b16 %v302
        %v404 = vunpack.c.l.b16 %v303
        %v405 = vunpack.c.l.b16 %v304
        %v406 = vunpack.c.l.b16 %v305
        %v407 = vunpack.c.l.b16 %v306
        %v408 = vunpack.c.l.b16 %v307
        %v409 = vunpack.c.l.b16 %v308
        %v410 = vunpack.c.l.b16 %v309
        %v411 = vpack.c.b16 %v404, %v403
        %v412 = vpack.c.b16 %v406, %v405
        %v413 = vpack.c.b16 %v408, %v407
        %v414 = vpack.c.b16 %v410, %v409
        %v420 = vsel %vm373, %v391, 0
        %422 = vmatpush.bf16.msra.mxu0 0
        %423 = vmatpush.bf16.msra.mxu0 0
        %424 = vmatpush.bf16.msra.mxu0 0
        %425 = vmatpush.bf16.msra.mxu0 0
        %426 = vmatpush.bf16.msra.mxu0 %v414
        %427 = vmatpush.bf16.msra.mxu0 %v413
        %428 = vmatpush.bf16.msra.mxu0 %v412
        %429 = vmatpush.bf16.msra.mxu0 %v411
        %430 = vmatmul.bf16.gmra.mxu0 %v420
        %v431 = vpop.f32.mrf.mxu0
        %v432 = vadd.f32 %v393, %v431
        %v433 = vpop.f32.mrf.mxu0
        %434 = vdwg.mxu0
        %v435 = vpack.c.bf16 %v432, %v432
        %vm436 = vcmask 257024
        %437 = vst.msk [vmem:[%s286] sm:$0xf] %vm436, %v435
        %s438 = sand.u32 %s182, 1
        %s439 = scalar_lea.sflag [#allocation4], %s438
        %s440 = sand.u32 %s182, 1
        %s441 = smul.addr %s440, 4
        %s442 = scalar_lea.vmem [#allocation5], %s441
        // Predicated region
        $region53: #{tpu_custom_call.1} parent=47 // pred_check
          %p443 = pneg %p192
        $region54: #{tpu_custom_call.1} parent=47 // pred_check_branch
          %445 = sbr.rel (%p443) target = $region56
        $region55: #{tpu_custom_call.1} parent=47 // pred_region
          %447 = vsyncadd %s439, 0
          %s448 = smul.addr %s22, 4
          %s449 = scalar_lea.hbm %s7, %s448
          %s451 = sshll.u32 %s442, 4
          %s452 = int_to_ptr.vmem [resolvable:$true] %s451
          %s453 = sshll.u32 %s449, 4
          %s454 = int_to_ptr.hbm [resolvable:$true] %s453
          %456 = dma.vmem_to_hbm [thread:$0]  %s452, 64, %s454, %s439
        $region56: #{tpu_custom_call.1} parent=47 // pred_fallthru
          _
      $region48: #{tpu_custom_call.1} parent=5 // pred_fallthru
        _
      %p457 = scmp.le.s32.totalorder 2, %s17
      // Predicated region
      $region57: #{tpu_custom_call.1} parent=5 // pred_check
        %p458 = pneg %p457
      $region58: #{tpu_custom_call.1} parent=5 // pred_check_branch
        %460 = sbr.rel (%p458) target = $region60
      $region59: #{tpu_custom_call.1} parent=5 // pred_region
        %s461 = ssub.s32 %s17, 2
        // Predicated region
        $region61: #{tpu_custom_call.1} parent=59 // pred_check
          %p462 = pneg %p198
        $region62: #{tpu_custom_call.1} parent=59 // pred_check_branch
          %464 = sbr.rel (%p462) target = $region64
        $region63: #{tpu_custom_call.1} parent=59 // pred_region
          %s465 = sand.u32 %s183, 1
          %s466 = scalar_lea.sflag [#allocation4], %s465
          %s467 = sand.u32 %s183, 1
          %s468 = smul.addr %s467, 4
          %s469 = scalar_lea.vmem [#allocation5], %s468
          %471 = dma.done %s466, 64
        $region64: #{tpu_custom_call.1} parent=59 // pred_fallthru
          _
      $region60: #{tpu_custom_call.1} parent=5 // pred_fallthru
        _
    $region6: #{tpu_custom_call.1} parent=1 // loop_footer
      %s21 = sadd.s32 1, %s17
    $region7: #{tpu_custom_call.1} parent=1 // loop_footer_branch
      %16 = sbr.rel target = $region3
    $region8: #{tpu_custom_call.1} parent=1 // loop_exit
      _
    %472 = vsyncpa [#allocation3], 1
    %s473 = scalar_lea.sflag [#allocation3], 1
    %474 = vsyncpa %s473, 1
    %475 = vsyncpa [#allocation4], 1
    %s476 = scalar_lea.sflag [#allocation4], 1
    %477 = vsyncpa %s476, 1

</llo_original>
